<compile_context>
chip_gen: v5e
topology: v5e:2x2
jax: 0.10.0
libtpu: 0.0.40
codegen_flags: <defaults>
</compile_context>

<pallas_src>
import jax
import jax.numpy as jnp
from jax.experimental import pallas as pl
from jax.experimental.pallas import tpu as pltpu

LANE = 128  # TPU vreg lane width


def _round_up(x, m):
    return (x + m - 1) // m * m


# ----------------------------- Pallas kernel ------------------------------- #

def _mlp_kernel(x_ref, w1_ref, b1_ref, w2_ref, b2_ref, w3_ref, b3_ref, o_ref):
    """Fused MLP forward for one batch tile.

    Computes:  relu(relu(x @ W1 + b1) @ W2 + b2) @ W3 + b3
    All matmuls run on the MXU with bf16 operands and f32 accumulation; bias add
    and ReLU run on the VPU in f32.  Hidden dims are pre-padded to 128 lanes; the
    final matmul/store use the logical output width directly (no padded writeback).
    """
    x = x_ref[...]  # bf16 (tile_b, d_in)
    h1 = jnp.dot(x, w1_ref[...], preferred_element_type=jnp.float32) + b1_ref[...]
    h1 = jnp.maximum(h1, 0.0).astype(jnp.bfloat16)
    h2 = jnp.dot(h1, w2_ref[...], preferred_element_type=jnp.float32) + b2_ref[...]
    h2 = jnp.maximum(h2, 0.0).astype(jnp.bfloat16)
    out = jnp.dot(h2, w3_ref[...], preferred_element_type=jnp.float32) + b3_ref[...]
    o_ref[...] = out.astype(o_ref.dtype)


def _mlp_pallas(x2d_bf16, w1p, b1p, w2p, b2p, w3p, b3p, *, tile_b=2048):
    """Runs the fused MLP over a flat (B, input_dim) bf16 batch, tiled along B.

    Hidden feature dims must already be lane-padded (multiples of 128); the output
    dim is the logical one.  Returns (B, output_dim) in float32.
    """
    B, d_in = x2d_bf16.shape
    d_h1p = w1p.shape[1]
    d_h2p = w2p.shape[1]
    d_out = w3p.shape[1]

    # Tile clamp: big tiles amortize the ~0.35us per-grid-step overhead, but on
    # v7x both TensorCores only see work via grid sharding, so guarantee >=2 grid
    # steps whenever the batch can be split.  Multiple of 16 for bf16 sublanes.
    tile_b = int(max(16, min(tile_b, _round_up(pl.cdiv(B, 2), 16))))
    grid = (pl.cdiv(B, tile_b),)  # ragged last block: Pallas masks the store

    full = lambda i: (0, 0)  # weights/biases: same whole block for every tile
    # NOTE: constant-index blocks are DMA'd once; we skip pipeline_mode=pl.Buffered(1)
    # since the extra buffer is only ~tens of KiB here.

    # VMEM budget: resident weights/biases, double-buffered x/out tiles, and the
    # in-kernel h1/h2 intermediates (f32 + their bf16 recasts).
    w_bytes = (w1p.size + w2p.size + w3p.size) * 2 + (b1p.size + b2p.size + b3p.size) * 4
    in_bytes = 2 * tile_b * d_in * 2          # double-buffered bf16 input tile
    out_bytes = 2 * tile_b * d_out * 4        # double-buffered f32 output tile
    interm_bytes = tile_b * (d_h1p + d_h2p) * (4 + 2)
    needed = 2 * w_bytes + in_bytes + out_bytes + interm_bytes
    try:
        cap = getattr(pltpu.get_tpu_info(), "vmem_capacity_bytes", None) \
            or 64 * 1024 * 1024
    except Exception:
        cap = 64 * 1024 * 1024                # v7x worst case if query unavailable
    ceiling = int(cap * 5 // 8)               # ~40 MiB on v7x, ~80 MiB on v5e/v6e
    vmem_limit = int(min(ceiling, max(16 * 1024 * 1024, 2 * needed)))

    flops = 2 * B * (d_in * d_h1p + d_h1p * d_h2p + d_h2p * d_out)
    bytes_accessed = B * (d_in * 2 + d_out * 4) + w_bytes

    out = pl.pallas_call(
        _mlp_kernel,
        out_shape=jax.ShapeDtypeStruct((B, d_out), jnp.float32),
        grid_spec=pl.GridSpec(
            grid=grid,
            in_specs=[
                # TODO(synk): if input_dim grows beyond toy sizes, lane-pad d_in to
                # a multiple of 128 as well; at d_in=32 the narrow loads are noise.
                pl.BlockSpec((tile_b, d_in), lambda i: (i, 0)),
                pl.BlockSpec((d_in, d_h1p), full),
                pl.BlockSpec((1, d_h1p), full),
                pl.BlockSpec((d_h1p, d_h2p), full),
                pl.BlockSpec((1, d_h2p), full),
                pl.BlockSpec((d_h2p, d_out), full),
                pl.BlockSpec((1, d_out), full),
            ],
            out_specs=pl.BlockSpec((tile_b, d_out), lambda i: (i, 0)),
        ),
        compiler_params=pltpu.CompilerParams(
            dimension_semantics=("parallel",),  # batch axis shards across cores
            vmem_limit_bytes=vmem_limit,
        ),
        cost_estimate=pl.CostEstimate(
            flops=int(flops), transcendentals=0, bytes_accessed=int(bytes_accessed)),
    )(x2d_bf16, w1p, b1p, w2p, b2p, w3p, b3p)
    return out


# --------------------------- Estimator (JAX side) --------------------------- #

class PallasEstimator:
    """JAX/Pallas port of gfn.estimators.Estimator with an MLP module and
    IdentityPreprocessor."""

    def __init__(self, input_dim, hidden_dim, output_dim, key, tile_b=2048):
        self.input_dim = input_dim
        self.hidden_dim = hidden_dim
        self.output_dim = output_dim
        self.is_backward = False
        self.tile_b = tile_b

        # Deterministic parameter init (matches nn.Linear shapes; stored transposed
        # so the kernel computes x @ W directly).  Master copies stay f32.
        k = jax.random.split(key, 6)

        def init_linear(kw, kb, fan_in, fan_out):
            bound = 1.0 / jnp.sqrt(fan_in)
            w = jax.random.uniform(kw, (fan_in, fan_out), jnp.float32, -bound, bound)
            b = jax.random.uniform(kb, (1, fan_out), jnp.float32, -bound, bound)
            return w, b

        self.w1, self.b1 = init_linear(k[0], k[1], input_dim, hidden_dim)
        self.w2, self.b2 = init_linear(k[2], k[3], hidden_dim, hidden_dim)
        self.w3, self.b3 = init_linear(k[4], k[5], hidden_dim, output_dim)

        # Kernel-side parameters, built ONCE at init:
        #   - hidden dims zero-padded to 128 lanes (zero W columns + zero bias pad
        #     keep padded lanes exactly 0 through ReLU),
        #   - weights cast to bf16 for MXU throughput / HBM bytes,
        #   - biases kept f32 (added to the f32 accumulators),
        #   - W3 / b3 keep the *logical* output width so the kernel stores
        #     (tile_b, output_dim) directly — no padded writeback, no wrapper slice.
        d_h_p = _round_up(hidden_dim, LANE)

        def pad2(a, rows, cols):
            return jnp.zeros((rows, cols), a.dtype).at[: a.shape[0], : a.shape[1]].set(a)

        self.w1p = pad2(self.w1, input_dim, d_h_p).astype(jnp.bfloat16)
        self.b1p = pad2(self.b1, 1, d_h_p)                       # f32
        self.w2p = pad2(self.w2, d_h_p, d_h_p).astype(jnp.bfloat16)
        self.b2p = pad2(self.b2, 1, d_h_p)                       # f32
        self.w3p = pad2(self.w3, d_h_p, output_dim).astype(jnp.bfloat16)
        self.b3p = self.b3                                       # (1, output_dim) f32

    @property
    def expected_output_dim(self):
        return self.output_dim

    def preprocessor(self, states_tensor):
        # IdentityPreprocessor: flatten state features to (*batch_shape, input_dim),
        # cast to float.
        batch_shape = states_tensor.shape[:-1]
        assert states_tensor.shape[-1] == self.input_dim
        return states_tensor.astype(jnp.float32), batch_shape

    def __call__(self, states_tensor):
        x, batch_shape = self.preprocessor(states_tensor)
        x2d = x.reshape((-1, self.input_dim)).astype(jnp.bfloat16)  # bf16 MXU feed
        out2d = _mlp_pallas(
            x2d, self.w1p, self.b1p, self.w2p, self.b2p, self.w3p, self.b3p,
            tile_b=self.tile_b,
        )
        out = out2d.reshape((*batch_shape, self.output_dim))
        # Estimator.forward's assert:
        assert out.shape[-1] == self.expected_output_dim, (
            f"Module output shape {out.shape} does not match expected output "
            f"dimension {self.expected_output_dim}"
        )
        return out

    # TODO(synk): to_probability_distribution (torch.distributions.Categorical)
    # has no Pallas equivalent; logits are returned instead.


# ----------------------------------- main ----------------------------------- #

if __name__ == "__main__":
    key = jax.random.PRNGKey(0)
    k_params, k_states = jax.random.split(key)

    input_dim, hidden_dim, output_dim = 32, 64, 16
    batch_shape = (2, 4)  # flat batch of 8 states

    estimator = PallasEstimator(input_dim, hidden_dim, output_dim, k_params)

    # Synthetic "preprocessed-states" tensor: (*batch_shape, input_dim).
    states_tensor = jax.random.normal(
        k_states, (*batch_shape, input_dim), dtype=jnp.float32
    )

    out = estimator(states_tensor)
    out = jax.block_until_ready(out)

    # Reference 1: plain-JAX mirror of the kernel's bf16-operand / f32-accumulate
    # path (same math, no Pallas) — checks the kernel itself.
    w1b = estimator.w1.astype(jnp.bfloat16)
    w2b = estimator.w2.astype(jnp.bfloat16)
    w3b = estimator.w3.astype(jnp.bfloat16)

    def ref_bf16(x):
        xb = x.astype(jnp.bfloat16)
        h1 = jnp.dot(xb, w1b, preferred_element_type=jnp.float32) + estimator.b1
        h1 = jnp.maximum(h1, 0.0).astype(jnp.bfloat16)
        h2 = jnp.dot(h1, w2b, preferred_element_type=jnp.float32) + estimator.b2
        h2 = jnp.maximum(h2, 0.0).astype(jnp.bfloat16)
        return jnp.dot(h2, w3b, preferred_element_type=jnp.float32) + estimator.b3

    expected = ref_bf16(states_tensor.reshape(-1, input_dim)).reshape(
        (*batch_shape, output_dim)
    )
    assert out.shape == (*batch_shape, output_dim)
    assert out.dtype == jnp.float32
    assert jnp.allclose(out, expected, atol=1e-2, rtol=1e-2)

    # Reference 2: full-f32 MLP, loose tolerance (bf16 operand rounding).
    def ref_f32(x):
        h1 = jnp.maximum(x @ estimator.w1 + estimator.b1, 0.0)
        h2 = jnp.maximum(h1 @ estimator.w2 + estimator.b2, 0.0)
        return h2 @ estimator.w3 + estimator.b3

    expected_f32 = ref_f32(states_tensor.reshape(-1, input_dim)).reshape(
        (*batch_shape, output_dim)
    )
    assert jnp.allclose(out, expected_f32, atol=1e-1, rtol=1e-1)

    print("KERNEL_OK")
</pallas_src>

<mosaic_0001>
module attributes {stable_mosaic.version = 11 : i64} {
  func.func @_mlp_kernel(%arg0: i32, %arg1: memref<16x32xbf16, #tpu.memory_space<vmem>>, %arg2: memref<32x128xbf16, #tpu.memory_space<vmem>>, %arg3: memref<1x128xf32, #tpu.memory_space<vmem>>, %arg4: memref<128x128xbf16, #tpu.memory_space<vmem>>, %arg5: memref<1x128xf32, #tpu.memory_space<vmem>>, %arg6: memref<128x16xbf16, #tpu.memory_space<vmem>>, %arg7: memref<1x16xf32, #tpu.memory_space<vmem>>, %arg8: memref<16x16xf32, #tpu.memory_space<vmem>>) attributes {dimension_semantics = [#tpu.dimension_semantics<parallel>], iteration_bounds = array<i64: 1>, scalar_prefetch = 0 : i64, scratch_operands = 0 : i64, tpu.core_type = #tpu.core_type<tc>, window_params = [{transform_indices = @transform_0, window_bounds = array<i64: 16, 32>}, {pipeline_mode = #tpu.pipeline_mode<synchronous>, transform_indices = @transform_1, window_bounds = array<i64: 32, 128>}, {pipeline_mode = #tpu.pipeline_mode<synchronous>, transform_indices = @transform_2, window_bounds = array<i64: 1, 128>}, {pipeline_mode = #tpu.pipeline_mode<synchronous>, transform_indices = @transform_3, window_bounds = array<i64: 128, 128>}, {pipeline_mode = #tpu.pipeline_mode<synchronous>, transform_indices = @transform_4, window_bounds = array<i64: 1, 128>}, {pipeline_mode = #tpu.pipeline_mode<synchronous>, transform_indices = @transform_5, window_bounds = array<i64: 128, 16>}, {pipeline_mode = #tpu.pipeline_mode<synchronous>, transform_indices = @transform_6, window_bounds = array<i64: 1, 16>}, {transform_indices = @transform_7, window_bounds = array<i64: 16, 16>}]} {
    %c0 = arith.constant 0 : index
    %c0_0 = arith.constant 0 : index
    %0 = vector.load %arg1[%c0, %c0_0] : memref<16x32xbf16, #tpu.memory_space<vmem>>, vector<16x32xbf16>
    %c0_1 = arith.constant 0 : index
    %c0_2 = arith.constant 0 : index
    %1 = vector.load %arg2[%c0_1, %c0_2] : memref<32x128xbf16, #tpu.memory_space<vmem>>, vector<32x128xbf16>
    %cst = arith.constant dense<0.000000e+00> : vector<16x128xf32>
    %2 = tpu.matmul %0, %1, %cst {dimension_numbers = #tpu.dot_dimension_numbers<[1], [0], [0], [1], [0, 0, 1, 1], [], []>} : vector<16x32xbf16>, vector<32x128xbf16>, vector<16x128xf32> -> vector<16x128xf32>
    %c0_3 = arith.constant 0 : index
    %c0_4 = arith.constant 0 : index
    %3 = vector.load %arg3[%c0_3, %c0_4] : memref<1x128xf32, #tpu.memory_space<vmem>>, vector<1x128xf32>
    %4 = vector.broadcast %3 : vector<1x128xf32> to vector<16x128xf32>
    %5 = arith.addf %2, %4 : vector<16x128xf32>
    %cst_5 = arith.constant 0.000000e+00 : f32
    %6 = vector.broadcast %cst_5 : f32 to vector<16x128xf32>
    %7 = arith.maximumf %5, %6 : vector<16x128xf32>
    %8 = arith.truncf %7 : vector<16x128xf32> to vector<16x128xbf16>
    %c0_6 = arith.constant 0 : index
    %c0_7 = arith.constant 0 : index
    %9 = vector.load %arg4[%c0_6, %c0_7] : memref<128x128xbf16, #tpu.memory_space<vmem>>, vector<128x128xbf16>
    %cst_8 = arith.constant dense<0.000000e+00> : vector<16x128xf32>
    %10 = tpu.matmul %8, %9, %cst_8 {dimension_numbers = #tpu.dot_dimension_numbers<[1], [0], [0], [1], [0, 0, 1, 1], [], []>} : vector<16x128xbf16>, vector<128x128xbf16>, vector<16x128xf32> -> vector<16x128xf32>
    %c0_9 = arith.constant 0 : index
    %c0_10 = arith.constant 0 : index
    %11 = vector.load %arg5[%c0_9, %c0_10] : memref<1x128xf32, #tpu.memory_space<vmem>>, vector<1x128xf32>
    %12 = vector.broadcast %11 : vector<1x128xf32> to vector<16x128xf32>
    %13 = arith.addf %10, %12 : vector<16x128xf32>
    %cst_11 = arith.constant 0.000000e+00 : f32
    %14 = vector.broadcast %cst_11 : f32 to vector<16x128xf32>
    %15 = arith.maximumf %13, %14 : vector<16x128xf32>
    %16 = arith.truncf %15 : vector<16x128xf32> to vector<16x128xbf16>
    %c0_12 = arith.constant 0 : index
    %c0_13 = arith.constant 0 : index
    %17 = vector.load %arg6[%c0_12, %c0_13] : memref<128x16xbf16, #tpu.memory_space<vmem>>, vector<128x16xbf16>
    %cst_14 = arith.constant dense<0.000000e+00> : vector<16x16xf32>
    %18 = tpu.matmul %16, %17, %cst_14 {dimension_numbers = #tpu.dot_dimension_numbers<[1], [0], [0], [1], [0, 0, 1, 1], [], []>} : vector<16x128xbf16>, vector<128x16xbf16>, vector<16x16xf32> -> vector<16x16xf32>
    %c0_15 = arith.constant 0 : index
    %c0_16 = arith.constant 0 : index
    %19 = vector.load %arg7[%c0_15, %c0_16] : memref<1x16xf32, #tpu.memory_space<vmem>>, vector<1x16xf32>
    %20 = vector.broadcast %19 : vector<1x16xf32> to vector<16x16xf32>
    %21 = arith.addf %18, %20 : vector<16x16xf32>
    %c0_17 = arith.constant 0 : index
    %c0_18 = arith.constant 0 : index
    %22 = vector.load %arg8[%c0_17, %c0_18] : memref<16x16xf32, #tpu.memory_space<vmem>>, vector<16x16xf32>
    tpu.vector_store %arg8[%c0_17, %c0_18], %21 {strides = array<i32>} : memref<16x16xf32, #tpu.memory_space<vmem>>, vector<16x16xf32>,
    return
  }
  func.func @transform_0(%arg0: i32) -> (i32, i32) {
    %c0_i32 = arith.constant 0 : i32
    %c0_i32_0 = arith.constant 0 : i32
    return %arg0, %c0_i32 : i32, i32
  }
  func.func @transform_1(%arg0: i32) -> (i32, i32) {
    %c0_i32 = arith.constant 0 : i32
    %c0_i32_0 = arith.constant 0 : i32
    %c0_i32_1 = arith.constant 0 : i32
    return %c0_i32, %c0_i32_0 : i32, i32
  }
  func.func @transform_2(%arg0: i32) -> (i32, i32) {
    %c0_i32 = arith.constant 0 : i32
    %c0_i32_0 = arith.constant 0 : i32
    %c0_i32_1 = arith.constant 0 : i32
    return %c0_i32, %c0_i32_0 : i32, i32
  }
  func.func @transform_3(%arg0: i32) -> (i32, i32) {
    %c0_i32 = arith.constant 0 : i32
    %c0_i32_0 = arith.constant 0 : i32
    %c0_i32_1 = arith.constant 0 : i32
    return %c0_i32, %c0_i32_0 : i32, i32
  }
  func.func @transform_4(%arg0: i32) -> (i32, i32) {
    %c0_i32 = arith.constant 0 : i32
    %c0_i32_0 = arith.constant 0 : i32
    %c0_i32_1 = arith.constant 0 : i32
    return %c0_i32, %c0_i32_0 : i32, i32
  }
  func.func @transform_5(%arg0: i32) -> (i32, i32) {
    %c0_i32 = arith.constant 0 : i32
    %c0_i32_0 = arith.constant 0 : i32
    %c0_i32_1 = arith.constant 0 : i32
    return %c0_i32, %c0_i32_0 : i32, i32
  }
  func.func @transform_6(%arg0: i32) -> (i32, i32) {
    %c0_i32 = arith.constant 0 : i32
    %c0_i32_0 = arith.constant 0 : i32
    %c0_i32_1 = arith.constant 0 : i32
    return %c0_i32, %c0_i32_0 : i32, i32
  }
  func.func @transform_7(%arg0: i32) -> (i32, i32) {
    %c0_i32 = arith.constant 0 : i32
    %c0_i32_0 = arith.constant 0 : i32
    return %arg0, %c0_i32 : i32, i32
  }
}

</mosaic_0001>

<llo_original>
// kernel: tpu_custom_call.1
$region0: #{tpu_custom_call.1}
  #allocation0 [shape = 'u32[]', space=smem, size = 0x4, offset = 0x4, fixed_abs, tag = 'smem constant byte address 0x4 - core index']
  #allocation1 [shape = 'u32[72,128]{1,0:T(1,128)}', space=vmem, size = 0x9000, scoped, tag = 'internal scratch']
  %s0 = inlined_call_operand.vmem [shape: bf16[8,32], index: 0, kind: input, shape index: {}]
  %s1 = inlined_call_operand.hbm [shape: bf16[32,128], index: 1, kind: input, shape index: {}]
  %s2 = inlined_call_operand.vmem [shape: f32[1,128], index: 2, kind: input, shape index: {}]
  %s3 = inlined_call_operand.vmem [shape: bf16[128,128], index: 3, kind: input, shape index: {}]
  %s4 = inlined_call_operand.vmem [shape: f32[1,128], index: 4, kind: input, shape index: {}]
  %s5 = inlined_call_operand.vmem [shape: bf16[128,16], index: 5, kind: input, shape index: {}]
  %s6 = inlined_call_operand.vmem [shape: f32[1,16], index: 6, kind: input, shape index: {}]
  %s7 = inlined_call_operand.hbm [shape: f32[8,16], index: 7, kind: output, shape index: {}]
  %s8 = sld [smem:[#allocation0]]
  $region42: #{tpu_custom_call.1} parent=0
    _
  %s10 = ssub.s32 1, %s8
  %s11 = scalar_select 0, %s10, %s8
  $region1: #{tpu_custom_call.1} parent=0
    #allocation2 [shape = 'u8[8192]{0}', space=vmem, size = 0x2000, scoped, tag = 'input window, operand 1, single buffered']
    #allocation3 [shape = 's32[1]{0}', space=sflag, size = 0x4, scoped, tag = 'scoped memory for tpu_custom_call.1']
    #allocation4 [shape = 's32[1]{0}', space=sflag, size = 0x4, scoped, tag = 'scoped memory for tpu_custom_call.1']
    #allocation5 [shape = 'u8[8192]{0}', space=vmem, size = 0x2000, scoped, tag = 'output window, operand 0, single buffered']
    %12 = vsyncpa [#allocation3], 0
    %13 = vsyncpa [#allocation4], 0
    // Predicated region
    $region2: #{tpu_custom_call.1} parent=1 // pred_check
      _
    $region3: #{tpu_custom_call.1} parent=1 // pred_check_branch
      %15 = sbr.rel (0) target = $region5
    $region4: #{tpu_custom_call.1} parent=1 // pred_region
      _
    $region5: #{tpu_custom_call.1} parent=1 // pred_fallthru
      _
    // Predicated region
    $region6: #{tpu_custom_call.1} parent=1 // pred_check
      _
    $region7: #{tpu_custom_call.1} parent=1 // pred_check_branch
      %17 = sbr.rel (0) target = $region9
    $region8: #{tpu_custom_call.1} parent=1 // pred_region
      %19 = vsyncadd [#allocation3], 0
      %s20 = sshll.u32 %s1, 4
      %s21 = int_to_ptr.hbm [resolvable:$true] %s20
      %s22 = sshll.u32 [#allocation2], 4
      %s23 = int_to_ptr.vmem [resolvable:$true] %s22
      %28 = dma.hbm_to_vmem [thread:$0]  %s21, 256, %s23, [#allocation3], 64, 64, 4
    $region9: #{tpu_custom_call.1} parent=1 // pred_fallthru
      _
    // Predicated region
    $region10: #{tpu_custom_call.1} parent=1 // pred_check
      _
    $region11: #{tpu_custom_call.1} parent=1 // pred_check_branch
      %30 = sbr.rel (0) target = $region13
    $region12: #{tpu_custom_call.1} parent=1 // pred_region
      _
    $region13: #{tpu_custom_call.1} parent=1 // pred_fallthru
      _
    // Predicated region
    $region14: #{tpu_custom_call.1} parent=1 // pred_check
      _
    $region15: #{tpu_custom_call.1} parent=1 // pred_check_branch
      %32 = sbr.rel (0) target = $region17
    $region16: #{tpu_custom_call.1} parent=1 // pred_region
      _
    $region17: #{tpu_custom_call.1} parent=1 // pred_fallthru
      _
    // Predicated region
    $region18: #{tpu_custom_call.1} parent=1 // pred_check
      _
    $region19: #{tpu_custom_call.1} parent=1 // pred_check_branch
      %34 = sbr.rel (0) target = $region21
    $region20: #{tpu_custom_call.1} parent=1 // pred_region
      _
    $region21: #{tpu_custom_call.1} parent=1 // pred_fallthru
      _
    // Predicated region
    $region22: #{tpu_custom_call.1} parent=1 // pred_check
      _
    $region23: #{tpu_custom_call.1} parent=1 // pred_check_branch
      %36 = sbr.rel (0) target = $region25
    $region24: #{tpu_custom_call.1} parent=1 // pred_region
      _
    $region25: #{tpu_custom_call.1} parent=1 // pred_fallthru
      _
    // Predicated region
    $region26: #{tpu_custom_call.1} parent=1 // pred_check
      _
    $region27: #{tpu_custom_call.1} parent=1 // pred_check_branch
      %38 = sbr.rel (0) target = $region29
    $region28: #{tpu_custom_call.1} parent=1 // pred_region
      _
    $region29: #{tpu_custom_call.1} parent=1 // pred_fallthru
      _
    // Predicated region
    $region30: #{tpu_custom_call.1} parent=1 // pred_check
      _
    $region31: #{tpu_custom_call.1} parent=1 // pred_check_branch
      %40 = sbr.rel (0) target = $region33
    $region32: #{tpu_custom_call.1} parent=1 // pred_region
      %42 = dma.done [#allocation3], 256
    $region33: #{tpu_custom_call.1} parent=1 // pred_fallthru
      _
    %v44 = vld [vmem:[%s0] sm:$0xf]
    %v45 = vld [vmem:[%s0 + $0x4] sm:$0xf]
    %v46 = vld [vmem:[#allocation2] sm:$0xf]
    %v47 = vld [vmem:[#allocation2 + $0x4] sm:$0xf]
    %v48 = vld [vmem:[#allocation2 + $0x8] sm:$0xf]
    %v49 = vld [vmem:[#allocation2 + $0xc] sm:$0xf]
    %v50 = vld [vmem:[%s2] sm:$0x1]
    %v52 = vperm.slane %v50, 0
    %v56 = vunpack.c.l.b16 %v44
    %v57 = vunpack.c.l.b16 %v45
    %v58 = vpack.c.b16 %v57, %v56
    %v63 = vunpack.c.l.b16 %v46
    %v64 = vunpack.c.l.b16 %v47
    %v65 = vunpack.c.l.b16 %v48
    %v66 = vunpack.c.l.b16 %v49
    %v67 = vpack.c.b16 %v64, %v63
    %v68 = vpack.c.b16 %v66, %v65
    %vm71 = vcmask 261120
    %v73 = vsel %vm71, %v58, 0
    %75 = vmatpush.bf16.msra.mxu0 0
    %76 = vmatpush.bf16.msra.mxu0 0
    %77 = vmatpush.bf16.msra.mxu0 0
    %78 = vmatpush.bf16.msra.mxu0 0
    %79 = vmatpush.bf16.msra.mxu0 0
    %80 = vmatpush.bf16.msra.mxu0 0
    %81 = vmatpush.bf16.msra.mxu0 %v68
    %82 = vmatpush.bf16.msra.mxu0 %v67
    %83 = vmatmul.bf16.gmra.mxu0 %v73
    %v84 = vpop.f32.mrf.mxu0
    %v85 = vadd.f32 %v52, %v84
    %v86 = vpop.f32.mrf.mxu0
    %v87 = vadd.f32 %v52, %v86
    %88 = vdwg.mxu0
    %v89 = vmax.f32 %v85, 0.0
    %v90 = vmax.f32 %v87, 0.0
    %v91 = vpack.c.bf16 %v90, %v89
    %v92 = vld [vmem:[%s3] sm:$0xf]
    %v93 = vld [vmem:[%s3 + $0x4] sm:$0xf]
    %v94 = vld [vmem:[%s3 + $0x8] sm:$0xf]
    %v95 = vld [vmem:[%s3 + $0xc] sm:$0xf]
    %v96 = vld [vmem:[%s3 + $0x10] sm:$0xf]
    %v97 = vld [vmem:[%s3 + $0x14] sm:$0xf]
    %v98 = vld [vmem:[%s3 + $0x18] sm:$0xf]
    %v99 = vld [vmem:[%s3 + $0x1c] sm:$0xf]
    %v100 = vld [vmem:[%s3 + $0x20] sm:$0xf]
    %v101 = vld [vmem:[%s3 + $0x24] sm:$0xf]
    %v102 = vld [vmem:[%s3 + $0x28] sm:$0xf]
    %v103 = vld [vmem:[%s3 + $0x2c] sm:$0xf]
    %v104 = vld [vmem:[%s3 + $0x30] sm:$0xf]
    %v105 = vld [vmem:[%s3 + $0x34] sm:$0xf]
    %v106 = vld [vmem:[%s3 + $0x38] sm:$0xf]
    %v107 = vld [vmem:[%s3 + $0x3c] sm:$0xf]
    %v108 = vld [vmem:[%s4] sm:$0x1]
    %v110 = vperm.slane %v108, 0
    %v128 = vunpack.c.l.b16 %v92
    %v129 = vunpack.c.l.b16 %v93
    %v130 = vunpack.c.l.b16 %v94
    %v131 = vunpack.c.l.b16 %v95
    %v132 = vunpack.c.l.b16 %v96
    %v133 = vunpack.c.l.b16 %v97
    %v134 = vunpack.c.l.b16 %v98
    %v135 = vunpack.c.l.b16 %v99
    %v136 = vunpack.c.l.b16 %v100
    %v137 = vunpack.c.l.b16 %v101
    %v138 = vunpack.c.l.b16 %v102
    %v139 = vunpack.c.l.b16 %v103
    %v140 = vunpack.c.l.b16 %v104
    %v141 = vunpack.c.l.b16 %v105
    %v142 = vunpack.c.l.b16 %v106
    %v143 = vunpack.c.l.b16 %v107
    %v144 = vpack.c.b16 %v129, %v128
    %v145 = vpack.c.b16 %v131, %v130
    %v146 = vpack.c.b16 %v133, %v132
    %v147 = vpack.c.b16 %v135, %v134
    %v148 = vpack.c.b16 %v137, %v136
    %v149 = vpack.c.b16 %v139, %v138
    %v150 = vpack.c.b16 %v141, %v140
    %v151 = vpack.c.b16 %v143, %v142
    %160 = vmatpush.bf16.msra.mxu0 %v151
    %161 = vmatpush.bf16.msra.mxu0 %v150
    %162 = vmatpush.bf16.msra.mxu0 %v149
    %163 = vmatpush.bf16.msra.mxu0 %v148
    %164 = vmatpush.bf16.msra.mxu0 %v147
    %165 = vmatpush.bf16.msra.mxu0 %v146
    %166 = vmatpush.bf16.msra.mxu0 %v145
    %167 = vmatpush.bf16.msra.mxu0 %v144
    %168 = vmatmul.bf16.gmra.mxu0 %v91
    %v169 = vpop.f32.mrf.mxu0
    %v170 = vadd.f32 %v110, %v169
    %v171 = vpop.f32.mrf.mxu0
    %v172 = vadd.f32 %v110, %v171
    %173 = vdwg.mxu0
    %v174 = vmax.f32 %v170, 0.0
    %v175 = vmax.f32 %v172, 0.0
    %v176 = vpack.c.bf16 %v175, %v174
    %v177 = vld [vmem:[%s5] sm:$0xf]
    %v178 = vld [vmem:[%s5 + $0x4] sm:$0xf]
    %v179 = vld [vmem:[%s5 + $0x8] sm:$0xf]
    %v180 = vld [vmem:[%s5 + $0xc] sm:$0xf]
    %v181 = vld [vmem:[%s5 + $0x10] sm:$0xf]
    %v182 = vld [vmem:[%s5 + $0x14] sm:$0xf]
    %v183 = vld [vmem:[%s5 + $0x18] sm:$0xf]
    %v184 = vld [vmem:[%s5 + $0x1c] sm:$0xf]
    %v185 = vld [vmem:[%s5 + $0x20] sm:$0xf]
    %v186 = vld [vmem:[%s5 + $0x24] sm:$0xf]
    %v187 = vld [vmem:[%s5 + $0x28] sm:$0xf]
    %v188 = vld [vmem:[%s5 + $0x2c] sm:$0xf]
    %v189 = vld [vmem:[%s5 + $0x30] sm:$0xf]
    %v190 = vld [vmem:[%s5 + $0x34] sm:$0xf]
    %v191 = vld [vmem:[%s5 + $0x38] sm:$0xf]
    %v192 = vld [vmem:[%s5 + $0x3c] sm:$0xf]
    %v193 = vld [vmem:[%s6] sm:$0x1]
    %v195 = vperm.slane %v193, 0
    %v213 = vunpack.c.l.b16 %v177
    %v214 = vunpack.c.l.b16 %v178
    %v215 = vunpack.c.l.b16 %v179
    %v216 = vunpack.c.l.b16 %v180
    %v217 = vunpack.c.l.b16 %v181
    %v218 = vunpack.c.l.b16 %v182
    %v219 = vunpack.c.l.b16 %v183
    %v220 = vunpack.c.l.b16 %v184
    %v221 = vunpack.c.l.b16 %v185
    %v222 = vunpack.c.l.b16 %v186
    %v223 = vunpack.c.l.b16 %v187
    %v224 = vunpack.c.l.b16 %v188
    %v225 = vunpack.c.l.b16 %v189
    %v226 = vunpack.c.l.b16 %v190
    %v227 = vunpack.c.l.b16 %v191
    %v228 = vunpack.c.l.b16 %v192
    %v229 = vpack.c.b16 %v214, %v213
    %v230 = vpack.c.b16 %v216, %v215
    %v231 = vpack.c.b16 %v218, %v217
    %v232 = vpack.c.b16 %v220, %v219
    %v233 = vpack.c.b16 %v222, %v221
    %v234 = vpack.c.b16 %v224, %v223
    %v235 = vpack.c.b16 %v226, %v225
    %v236 = vpack.c.b16 %v228, %v227
    %245 = vmatpush.bf16.msra.mxu0 %v236
    %246 = vmatpush.bf16.msra.mxu0 %v235
    %247 = vmatpush.bf16.msra.mxu0 %v234
    %248 = vmatpush.bf16.msra.mxu0 %v233
    %249 = vmatpush.bf16.msra.mxu0 %v232
    %250 = vmatpush.bf16.msra.mxu0 %v231
    %251 = vmatpush.bf16.msra.mxu0 %v230
    %252 = vmatpush.bf16.msra.mxu0 %v229
    %253 = vmatmul.bf16.gmra.mxu0 %v176
    %v254 = vpop.f32.mrf.mxu0
    %v255 = vadd.f32 %v195, %v254
    %v256 = vpop.f32.mrf.mxu0
    %v257 = vadd.f32 %v195, %v256
    %258 = vdwg.mxu0
    %vm259 = vcmask 130048
    %260 = vst.msk [vmem:[#allocation5] sm:$0xff] %vm259, %v255
    %261 = vst.msk [vmem:[#allocation5 + $0x8] sm:$0xff] %vm259, %v257
    // Predicated region
    $region34: #{tpu_custom_call.1} parent=1 // pred_check
      _
    $region35: #{tpu_custom_call.1} parent=1 // pred_check_branch
      %263 = sbr.rel (0) target = $region37
    $region36: #{tpu_custom_call.1} parent=1 // pred_region
      %265 = vsyncadd [#allocation4], 128
      %s266 = sshll.u32 [#allocation5], 4
      %s267 = int_to_ptr.vmem [resolvable:$true] %s266
      %s268 = sshll.u32 %s7, 4
      %s269 = int_to_ptr.hbm [resolvable:$true] %s268
      %274 = dma.vmem_to_hbm [thread:$0]  %s267, 128, %s269, [#allocation4], 128, 128, 8
    $region37: #{tpu_custom_call.1} parent=1 // pred_fallthru
      _
    // Predicated region
    $region38: #{tpu_custom_call.1} parent=1 // pred_check
      _
    $region39: #{tpu_custom_call.1} parent=1 // pred_check_branch
      %276 = sbr.rel (0) target = $region41
    $region40: #{tpu_custom_call.1} parent=1 // pred_region
      %278 = dma.done [#allocation4], 256
    $region41: #{tpu_custom_call.1} parent=1 // pred_fallthru
      _
    %279 = vsyncpa [#allocation3], 1
    %280 = vsyncpa [#allocation4], 1

</llo_original>
